<compile_context>
chip_gen: v7x
topology: tpu7x:2x2x1
jax: 0.10.0
libtpu: 0.0.40
codegen_flags: <defaults>
</compile_context>

<pallas_src>
import jax
import jax.numpy as jnp
from jax.experimental import pallas as pl
from jax.experimental.pallas import tpu as pltpu


def policy_kernel(x_ref, w1_ref, b1_ref, w2t_ref, b2_ref, out_ref):
    # x_ref:   (s_size, TB)    batch on lanes
    # w1_ref:  (h_size, s_size)
    # b1_ref:  (h_size, 1)
    # w2t_ref: (h_size, a_size)
    # b2_ref:  (a_size, 1)
    # out_ref: (a_size, TB)
    s_size = x_ref.shape[0]
    h_size, a_size = w2t_ref.shape

    # ---- Layer 1 (VPU broadcast-FMA): h = relu(w1 @ x + b1) ----
    # Contraction over tiny s_size, unrolled at trace time; bias folded into
    # the accumulator init.  Everything is lane-dense (TB on the lane axis).
    h = b1_ref[...] + w1_ref[:, 0:1] * x_ref[0:1, :]            # (H, TB)
    for k in range(1, s_size):
        h = h + w1_ref[:, k:k + 1] * x_ref[k:k + 1, :]
    h = jnp.maximum(h, 0.0)

    # ---- Layer 2: logits = w2 @ h + b2, one sublane reduction per action ----
    rows = []
    for a in range(a_size):
        col = jnp.sum(w2t_ref[:, a:a + 1] * h, axis=0, keepdims=True)  # (1, TB)
        rows.append(b2_ref[a:a + 1, :] + col)

    # ---- Numerically stable softmax over the action axis (pure VPU) ----
    m = rows[0]
    for a in range(1, a_size):
        m = jnp.maximum(m, rows[a])
    exps = [jnp.exp(r - m) for r in rows]
    denom = exps[0]
    for a in range(1, a_size):
        denom = denom + exps[a]
    inv = 1.0 / denom        # exact divide: probs sum to 1 (log_prob-safe)

    # Lane-dense, unmasked stores: each row is a full (1, TB) slab.
    for a in range(a_size):
        out_ref[a:a + 1, :] = (exps[a] * inv).astype(out_ref.dtype)


def _batch_tile(batch):
    # Full block for small batches (full-dim tiling exception); 4096-row tiles
    # (multiple of 128 lanes) otherwise.  At 4096 rows the padded per-step VMEM
    # footprint is only a few hundred KiB, so this fits comfortably on
    # v5e/v6e/v7x while amortizing per-grid-step overhead.
    return batch if batch <= 4096 else 4096


@jax.jit
def policy_forward(x, w1, b1, w2, b2):
    """x: (B, s_size) f32; w1: (h_size, s_size); b1: (h_size,);
    w2: (a_size, h_size); b2: (a_size,).  Returns softmax probs (B, a_size)."""
    batch, s_size = x.shape
    a_size, h_size = w2.shape

    # Pure layout plumbing (jitted, fused by XLA): batch -> lane axis.
    x_t = x.T                                 # (s_size, B)
    w2_t = w2.T                               # (h_size, a_size)
    b1_2d = b1.reshape(h_size, 1)
    b2_2d = b2.reshape(a_size, 1)

    tb = _batch_tile(batch)
    grid = (pl.cdiv(batch, tb),)

    const = lambda shape: pl.BlockSpec(shape, lambda i: (0, 0))

    out_t = pl.pallas_call(
        policy_kernel,
        out_shape=jax.ShapeDtypeStruct((a_size, batch), jnp.float32),
        grid=grid,
        in_specs=[
            pl.BlockSpec((s_size, tb), lambda i: (0, i)),   # x: tiled over batch lanes
            const(w1.shape),                                # weights stay VMEM-resident
            const(b1_2d.shape),
            const(w2_t.shape),
            const(b2_2d.shape),
        ],
        out_specs=pl.BlockSpec((a_size, tb), lambda i: (0, i)),
        compiler_params=pltpu.CompilerParams(
            dimension_semantics=("parallel",),              # megacore / dual-TC sharding
        ),
    )(x_t, w1, b1_2d, w2_t, b2_2d)

    return out_t.T                                          # (B, a_size)


def init_params(key, s_size, h_size, a_size):
    """PyTorch-style uniform(-1/sqrt(fan_in), 1/sqrt(fan_in)) init.

    Layouts match nn.Linear.weight: w1 (h_size, s_size), w2 (a_size, h_size)."""
    k1, k2, k3, k4 = jax.random.split(key, 4)
    bound1 = 1.0 / jnp.sqrt(s_size)
    bound2 = 1.0 / jnp.sqrt(h_size)
    w1 = jax.random.uniform(k1, (h_size, s_size), jnp.float32, -bound1, bound1)
    b1 = jax.random.uniform(k2, (h_size,), jnp.float32, -bound1, bound1)
    w2 = jax.random.uniform(k3, (a_size, h_size), jnp.float32, -bound2, bound2)
    b2 = jax.random.uniform(k4, (a_size,), jnp.float32, -bound2, bound2)
    return w1, b1, w2, b2


def _reference(x, w1, b1, w2, b2):
    h = jnp.maximum(x @ w1.T + b1, 0.0)
    return jax.nn.softmax(h @ w2.T + b2, axis=1)


if __name__ == "__main__":
    # CartPole-like policy shapes: s_size=4, a_size=2, h_size=32, batch=2.
    B, s_size, h_size, a_size = 2, 4, 32, 2

    key = jax.random.PRNGKey(0)
    kx, kp, kb = jax.random.split(key, 3)
    x = jax.random.normal(kx, (B, s_size), jnp.float32)
    w1, b1, w2, b2 = init_params(kp, s_size, h_size, a_size)

    probs = policy_forward(x, w1, b1, w2, b2)
    probs = jax.block_until_ready(probs)

    ref = _reference(x, w1, b1, w2, b2)
    assert probs.shape == (B, a_size)
    assert jnp.allclose(probs, ref, atol=1e-5, rtol=1e-5)
    assert jnp.allclose(jnp.sum(probs, axis=1), 1.0, atol=1e-5)

    # Also exercise the tiled grid path (multiple 4096-row tiles + partial tail).
    B_big = 8200
    x_big = jax.random.normal(kb, (B_big, s_size), jnp.float32)
    probs_big = jax.block_until_ready(policy_forward(x_big, w1, b1, w2, b2))
    ref_big = _reference(x_big, w1, b1, w2, b2)
    assert probs_big.shape == (B_big, a_size)
    assert jnp.allclose(probs_big, ref_big, atol=1e-5, rtol=1e-5)

    print("KERNEL_OK")
</pallas_src>

<mosaic_0001>
module attributes {stable_mosaic.version = 11 : i64} {
  func.func @policy_kernel(%arg0: i32, %arg1: memref<4x2xf32, #tpu.memory_space<vmem>>, %arg2: memref<32x4xf32, #tpu.memory_space<vmem>>, %arg3: memref<32x1xf32, #tpu.memory_space<vmem>>, %arg4: memref<32x2xf32, #tpu.memory_space<vmem>>, %arg5: memref<2x1xf32, #tpu.memory_space<vmem>>, %arg6: memref<2x2xf32, #tpu.memory_space<vmem>>) attributes {dimension_semantics = [#tpu.dimension_semantics<parallel>], iteration_bounds = array<i64: 1>, scalar_prefetch = 0 : i64, scratch_operands = 0 : i64, tpu.core_type = #tpu.core_type<tc>, window_params = [{transform_indices = @transform_0, window_bounds = array<i64: 4, 2>}, {pipeline_mode = #tpu.pipeline_mode<synchronous>, transform_indices = @transform_1, window_bounds = array<i64: 32, 4>}, {pipeline_mode = #tpu.pipeline_mode<synchronous>, transform_indices = @transform_2, window_bounds = array<i64: 32, 1>}, {pipeline_mode = #tpu.pipeline_mode<synchronous>, transform_indices = @transform_3, window_bounds = array<i64: 32, 2>}, {pipeline_mode = #tpu.pipeline_mode<synchronous>, transform_indices = @transform_4, window_bounds = array<i64: 2, 1>}, {transform_indices = @transform_5, window_bounds = array<i64: 2, 2>}]} {
    %c0 = arith.constant 0 : index
    %c0_0 = arith.constant 0 : index
    %0 = vector.load %arg3[%c0, %c0_0] : memref<32x1xf32, #tpu.memory_space<vmem>>, vector<32x1xf32>
    %c0_1 = arith.constant 0 : index
    %c0_2 = arith.constant 0 : index
    %1 = vector.load %arg2[%c0_1, %c0_2] : memref<32x4xf32, #tpu.memory_space<vmem>>, vector<32x1xf32>
    %c0_3 = arith.constant 0 : index
    %c0_4 = arith.constant 0 : index
    %2 = vector.load %arg1[%c0_3, %c0_4] : memref<4x2xf32, #tpu.memory_space<vmem>>, vector<1x2xf32>
    %3 = vector.broadcast %1 : vector<32x1xf32> to vector<32x2xf32>
    %4 = vector.broadcast %2 : vector<1x2xf32> to vector<32x2xf32>
    %5 = arith.mulf %3, %4 : vector<32x2xf32>
    %6 = vector.broadcast %0 : vector<32x1xf32> to vector<32x2xf32>
    %7 = arith.addf %6, %5 : vector<32x2xf32>
    %c0_5 = arith.constant 0 : index
    %c1 = arith.constant 1 : index
    %8 = vector.load %arg2[%c0_5, %c1] : memref<32x4xf32, #tpu.memory_space<vmem>>, vector<32x1xf32>
    %c1_6 = arith.constant 1 : index
    %c0_7 = arith.constant 0 : index
    %9 = vector.load %arg1[%c1_6, %c0_7] : memref<4x2xf32, #tpu.memory_space<vmem>>, vector<1x2xf32>
    %10 = vector.broadcast %8 : vector<32x1xf32> to vector<32x2xf32>
    %11 = vector.broadcast %9 : vector<1x2xf32> to vector<32x2xf32>
    %12 = arith.mulf %10, %11 : vector<32x2xf32>
    %13 = arith.addf %7, %12 : vector<32x2xf32>
    %c0_8 = arith.constant 0 : index
    %c2 = arith.constant 2 : index
    %14 = vector.load %arg2[%c0_8, %c2] : memref<32x4xf32, #tpu.memory_space<vmem>>, vector<32x1xf32>
    %c2_9 = arith.constant 2 : index
    %c0_10 = arith.constant 0 : index
    %15 = vector.load %arg1[%c2_9, %c0_10] : memref<4x2xf32, #tpu.memory_space<vmem>>, vector<1x2xf32>
    %16 = vector.broadcast %14 : vector<32x1xf32> to vector<32x2xf32>
    %17 = vector.broadcast %15 : vector<1x2xf32> to vector<32x2xf32>
    %18 = arith.mulf %16, %17 : vector<32x2xf32>
    %19 = arith.addf %13, %18 : vector<32x2xf32>
    %c0_11 = arith.constant 0 : index
    %c3 = arith.constant 3 : index
    %20 = vector.load %arg2[%c0_11, %c3] : memref<32x4xf32, #tpu.memory_space<vmem>>, vector<32x1xf32>
    %c3_12 = arith.constant 3 : index
    %c0_13 = arith.constant 0 : index
    %21 = vector.load %arg1[%c3_12, %c0_13] : memref<4x2xf32, #tpu.memory_space<vmem>>, vector<1x2xf32>
    %22 = vector.broadcast %20 : vector<32x1xf32> to vector<32x2xf32>
    %23 = vector.broadcast %21 : vector<1x2xf32> to vector<32x2xf32>
    %24 = arith.mulf %22, %23 : vector<32x2xf32>
    %25 = arith.addf %19, %24 : vector<32x2xf32>
    %cst = arith.constant 0.000000e+00 : f32
    %26 = vector.broadcast %cst : f32 to vector<32x2xf32>
    %27 = arith.maximumf %25, %26 : vector<32x2xf32>
    %c0_14 = arith.constant 0 : index
    %c0_15 = arith.constant 0 : index
    %28 = vector.load %arg4[%c0_14, %c0_15] : memref<32x2xf32, #tpu.memory_space<vmem>>, vector<32x1xf32>
    %29 = vector.broadcast %28 : vector<32x1xf32> to vector<32x2xf32>
    %30 = arith.mulf %29, %27 : vector<32x2xf32>
    %cst_16 = arith.constant dense<0.000000e+00> : vector<2xf32>
    %31 = vector.multi_reduction <add>, %30, %cst_16 [0] : vector<32x2xf32> to vector<2xf32>
    %32 = vector.shape_cast %31 : vector<2xf32> to vector<1x2xf32>
    %c0_17 = arith.constant 0 : index
    %c0_18 = arith.constant 0 : index
    %33 = vector.load %arg5[%c0_17, %c0_18] : memref<2x1xf32, #tpu.memory_space<vmem>>, vector<1x1xf32>
    %34 = vector.broadcast %33 : vector<1x1xf32> to vector<1x2xf32>
    %35 = arith.addf %34, %32 : vector<1x2xf32>
    %c0_19 = arith.constant 0 : index
    %c1_20 = arith.constant 1 : index
    %36 = vector.load %arg4[%c0_19, %c1_20] : memref<32x2xf32, #tpu.memory_space<vmem>>, vector<32x1xf32>
    %37 = vector.broadcast %36 : vector<32x1xf32> to vector<32x2xf32>
    %38 = arith.mulf %37, %27 : vector<32x2xf32>
    %cst_21 = arith.constant dense<0.000000e+00> : vector<2xf32>
    %39 = vector.multi_reduction <add>, %38, %cst_21 [0] : vector<32x2xf32> to vector<2xf32>
    %40 = vector.shape_cast %39 : vector<2xf32> to vector<1x2xf32>
    %c1_22 = arith.constant 1 : index
    %c0_23 = arith.constant 0 : index
    %41 = vector.load %arg5[%c1_22, %c0_23] : memref<2x1xf32, #tpu.memory_space<vmem>>, vector<1x1xf32>
    %42 = vector.broadcast %41 : vector<1x1xf32> to vector<1x2xf32>
    %43 = arith.addf %42, %40 : vector<1x2xf32>
    %44 = arith.maximumf %35, %43 : vector<1x2xf32>
    %45 = arith.subf %35, %44 : vector<1x2xf32>
    %46 = math.exp %45 : vector<1x2xf32>
    %47 = arith.subf %43, %44 : vector<1x2xf32>
    %48 = math.exp %47 : vector<1x2xf32>
    %49 = arith.addf %46, %48 : vector<1x2xf32>
    %cst_24 = arith.constant 1.000000e+00 : f32
    %50 = vector.broadcast %cst_24 : f32 to vector<1x2xf32>
    %51 = arith.divf %50, %49 : vector<1x2xf32>
    %52 = arith.mulf %46, %51 : vector<1x2xf32>
    %c0_25 = arith.constant 0 : index
    %c0_26 = arith.constant 0 : index
    %53 = vector.load %arg6[%c0_25, %c0_26] : memref<2x2xf32, #tpu.memory_space<vmem>>, vector<1x2xf32>
    tpu.vector_store %arg6[%c0_25, %c0_26], %52 {strides = array<i32>} : memref<2x2xf32, #tpu.memory_space<vmem>>, vector<1x2xf32>,
    %54 = arith.mulf %48, %51 : vector<1x2xf32>
    %c1_27 = arith.constant 1 : index
    %c0_28 = arith.constant 0 : index
    %55 = vector.load %arg6[%c1_27, %c0_28] : memref<2x2xf32, #tpu.memory_space<vmem>>, vector<1x2xf32>
    tpu.vector_store %arg6[%c1_27, %c0_28], %54 {strides = array<i32>} : memref<2x2xf32, #tpu.memory_space<vmem>>, vector<1x2xf32>,
    return
  }
  func.func @transform_0(%arg0: i32) -> (i32, i32) {
    %c0_i32 = arith.constant 0 : i32
    %c0_i32_0 = arith.constant 0 : i32
    return %c0_i32, %arg0 : i32, i32
  }
  func.func @transform_1(%arg0: i32) -> (i32, i32) {
    %c0_i32 = arith.constant 0 : i32
    %c0_i32_0 = arith.constant 0 : i32
    %c0_i32_1 = arith.constant 0 : i32
    return %c0_i32, %c0_i32_0 : i32, i32
  }
  func.func @transform_2(%arg0: i32) -> (i32, i32) {
    %c0_i32 = arith.constant 0 : i32
    %c0_i32_0 = arith.constant 0 : i32
    %c0_i32_1 = arith.constant 0 : i32
    return %c0_i32, %c0_i32_0 : i32, i32
  }
  func.func @transform_3(%arg0: i32) -> (i32, i32) {
    %c0_i32 = arith.constant 0 : i32
    %c0_i32_0 = arith.constant 0 : i32
    %c0_i32_1 = arith.constant 0 : i32
    return %c0_i32, %c0_i32_0 : i32, i32
  }
  func.func @transform_4(%arg0: i32) -> (i32, i32) {
    %c0_i32 = arith.constant 0 : i32
    %c0_i32_0 = arith.constant 0 : i32
    %c0_i32_1 = arith.constant 0 : i32
    return %c0_i32, %c0_i32_0 : i32, i32
  }
  func.func @transform_5(%arg0: i32) -> (i32, i32) {
    %c0_i32 = arith.constant 0 : i32
    %c0_i32_0 = arith.constant 0 : i32
    return %c0_i32, %arg0 : i32, i32
  }
}

</mosaic_0001>

<llo_original>
// kernel: policy_forward.1
$region0: #{policy_forward.1}
  #allocation0 [shape = 'u32[]', space=smem, size = 0x4, offset = 0x4, fixed_abs, tag = 'smem constant byte address 0x4 - core index']
  #allocation1 [shape = 'u32[144,128]{1,0:T(1,128)}', space=vmem, size = 0x12000, scoped, tag = 'internal scratch']
  %s0 = inlined_call_operand.vmem [shape: f32[4,2], index: 0, kind: input, shape index: {}]
  %s1 = inlined_call_operand.vmem [shape: f32[32,4], index: 1, kind: input, shape index: {}]
  %s2 = inlined_call_operand.vmem [shape: f32[32,1], index: 2, kind: input, shape index: {}]
  %s3 = inlined_call_operand.vmem [shape: f32[32,2], index: 3, kind: input, shape index: {}]
  %s4 = inlined_call_operand.vmem [shape: f32[2,1], index: 4, kind: input, shape index: {}]
  %s5 = inlined_call_operand.vmem [shape: f32[2,2], index: 5, kind: output, shape index: {}]
  %s6 = sld [smem:[#allocation0]]
  $region30: #{policy_forward.1} parent=0
    _
  %s8 = ssub.s32 1, %s6
  %s9 = scalar_select 0, %s8, %s6
  // Predicated region
  $region2: #{policy_forward.1} parent=0 // pred_check
    _
  $region3: #{policy_forward.1} parent=0 // pred_check_branch
    %11 = sbr.rel (0) target = $region5
  $region4: #{policy_forward.1} parent=0 // pred_region
    _
  $region5: #{policy_forward.1} parent=0 // pred_fallthru
    _
  // Predicated region
  $region6: #{policy_forward.1} parent=0 // pred_check
    _
  $region7: #{policy_forward.1} parent=0 // pred_check_branch
    %13 = sbr.rel (0) target = $region9
  $region8: #{policy_forward.1} parent=0 // pred_region
    _
  $region9: #{policy_forward.1} parent=0 // pred_fallthru
    _
  // Predicated region
  $region10: #{policy_forward.1} parent=0 // pred_check
    _
  $region11: #{policy_forward.1} parent=0 // pred_check_branch
    %15 = sbr.rel (0) target = $region13
  $region12: #{policy_forward.1} parent=0 // pred_region
    _
  $region13: #{policy_forward.1} parent=0 // pred_fallthru
    _
  // Predicated region
  $region14: #{policy_forward.1} parent=0 // pred_check
    _
  $region15: #{policy_forward.1} parent=0 // pred_check_branch
    %17 = sbr.rel (0) target = $region17
  $region16: #{policy_forward.1} parent=0 // pred_region
    _
  $region17: #{policy_forward.1} parent=0 // pred_fallthru
    _
  // Predicated region
  $region18: #{policy_forward.1} parent=0 // pred_check
    _
  $region19: #{policy_forward.1} parent=0 // pred_check_branch
    %19 = sbr.rel (0) target = $region21
  $region20: #{policy_forward.1} parent=0 // pred_region
    _
  $region21: #{policy_forward.1} parent=0 // pred_fallthru
    _
  %v20 = vld [vmem:[%s2] sm:$0xff]
  %v21 = vld [vmem:[%s2 + $0x8] sm:$0xff]
  %v22 = vld [vmem:[%s2 + $0x10] sm:$0xff]
  %v23 = vld [vmem:[%s2 + $0x18] sm:$0xff]
  %v24 = vld [vmem:[%s1] sm:$0xff]
  %v25 = vld [vmem:[%s1 + $0x8] sm:$0xff]
  %v26 = vld [vmem:[%s1 + $0x10] sm:$0xff]
  %v27 = vld [vmem:[%s1 + $0x18] sm:$0xff]
  %v28 = vld [vmem:[%s0] sm:$0x1]
  %30 = vset.pattern.permute.xlu0 0
  %31 = vperm.xlu0 %30, %v24
  %v32 = vpop.permute.xlu0 %31
  %35 = vset.pattern.permute.xlu0 0
  %36 = vperm.xlu0 %35, %v25
  %v37 = vpop.permute.xlu0 %36
  %40 = vset.pattern.permute.xlu0 0
  %41 = vperm.xlu0 %40, %v26
  %v42 = vpop.permute.xlu0 %41
  %45 = vset.pattern.permute.xlu0 0
  %46 = vperm.xlu0 %45, %v27
  %v47 = vpop.permute.xlu0 %46
  %v49 = vlaneseq
  %v50 = vshrl.u32 %v49, 7
  %v51 = vsub.s32 0, %v50
  %v52 = vrot.slane %v28, %v51
  %v53 = vmul.f32 %v32, %v52
  %v54 = vmul.f32 %v37, %v52
  %v55 = vmul.f32 %v42, %v52
  %v56 = vmul.f32 %v47, %v52
  %58 = vset.pattern.permute.xlu0 0
  %59 = vperm.xlu0 %58, %v20
  %v60 = vpop.permute.xlu0 %59
  %63 = vset.pattern.permute.xlu0 0
  %64 = vperm.xlu0 %63, %v21
  %v65 = vpop.permute.xlu0 %64
  %68 = vset.pattern.permute.xlu0 0
  %69 = vperm.xlu0 %68, %v22
  %v70 = vpop.permute.xlu0 %69
  %73 = vset.pattern.permute.xlu0 0
  %74 = vperm.xlu0 %73, %v23
  %v75 = vpop.permute.xlu0 %74
  %v77 = vadd.f32 %v60, %v53
  %v78 = vadd.f32 %v65, %v54
  %v79 = vadd.f32 %v70, %v55
  %v80 = vadd.f32 %v75, %v56
  %v81 = vld [vmem:[%s0 + $0x1] sm:$0x1]
  %82 = vset.pattern.permute.xlu0 1
  %83 = vperm.xlu0 %82, %v24
  %v84 = vpop.permute.xlu0 %83
  %86 = vset.pattern.permute.xlu0 1
  %87 = vperm.xlu0 %86, %v25
  %v88 = vpop.permute.xlu0 %87
  %90 = vset.pattern.permute.xlu0 1
  %91 = vperm.xlu0 %90, %v26
  %v92 = vpop.permute.xlu0 %91
  %94 = vset.pattern.permute.xlu0 1
  %95 = vperm.xlu0 %94, %v27
  %v96 = vpop.permute.xlu0 %95
  %v98 = vlaneseq
  %v99 = vshrl.u32 %v98, 7
  %v100 = vsub.s32 0, %v99
  %v101 = vrot.slane %v81, %v100
  %v102 = vmul.f32 %v84, %v101
  %v103 = vmul.f32 %v88, %v101
  %v104 = vmul.f32 %v92, %v101
  %v105 = vmul.f32 %v96, %v101
  %v106 = vadd.f32 %v77, %v102
  %v107 = vadd.f32 %v78, %v103
  %v108 = vadd.f32 %v79, %v104
  %v109 = vadd.f32 %v80, %v105
  %v110 = vld [vmem:[%s0 + $0x2] sm:$0x1]
  %111 = vset.pattern.permute.xlu0 2
  %112 = vperm.xlu0 %111, %v24
  %v113 = vpop.permute.xlu0 %112
  %115 = vset.pattern.permute.xlu0 2
  %116 = vperm.xlu0 %115, %v25
  %v117 = vpop.permute.xlu0 %116
  %119 = vset.pattern.permute.xlu0 2
  %120 = vperm.xlu0 %119, %v26
  %v121 = vpop.permute.xlu0 %120
  %123 = vset.pattern.permute.xlu0 2
  %124 = vperm.xlu0 %123, %v27
  %v125 = vpop.permute.xlu0 %124
  %v127 = vlaneseq
  %v128 = vshrl.u32 %v127, 7
  %v129 = vsub.s32 0, %v128
  %v130 = vrot.slane %v110, %v129
  %v131 = vmul.f32 %v113, %v130
  %v132 = vmul.f32 %v117, %v130
  %v133 = vmul.f32 %v121, %v130
  %v134 = vmul.f32 %v125, %v130
  %v135 = vadd.f32 %v106, %v131
  %v136 = vadd.f32 %v107, %v132
  %v137 = vadd.f32 %v108, %v133
  %v138 = vadd.f32 %v109, %v134
  %v139 = vld [vmem:[%s0 + $0x3] sm:$0x1]
  %140 = vset.pattern.permute.xlu0 3
  %141 = vperm.xlu0 %140, %v24
  %v142 = vpop.permute.xlu0 %141
  %144 = vset.pattern.permute.xlu0 3
  %145 = vperm.xlu0 %144, %v25
  %v146 = vpop.permute.xlu0 %145
  %148 = vset.pattern.permute.xlu0 3
  %149 = vperm.xlu0 %148, %v26
  %v150 = vpop.permute.xlu0 %149
  %152 = vset.pattern.permute.xlu0 3
  %153 = vperm.xlu0 %152, %v27
  %v154 = vpop.permute.xlu0 %153
  %v156 = vlaneseq
  %v157 = vshrl.u32 %v156, 7
  %v158 = vsub.s32 0, %v157
  %v159 = vrot.slane %v139, %v158
  %v160 = vmul.f32 %v142, %v159
  %v161 = vmul.f32 %v146, %v159
  %v162 = vmul.f32 %v150, %v159
  %v163 = vmul.f32 %v154, %v159
  %v164 = vadd.f32 %v135, %v160
  %v165 = vadd.f32 %v136, %v161
  %v166 = vadd.f32 %v137, %v162
  %v167 = vadd.f32 %v138, %v163
  %v168 = vmax.f32 %v164, 0.0
  %v169 = vmax.f32 %v165, 0.0
  %v170 = vmax.f32 %v166, 0.0
  %v171 = vmax.f32 %v167, 0.0
  %v172 = vld [vmem:[%s3] sm:$0xff]
  %v173 = vld [vmem:[%s3 + $0x8] sm:$0xff]
  %v174 = vld [vmem:[%s3 + $0x10] sm:$0xff]
  %v175 = vld [vmem:[%s3 + $0x18] sm:$0xff]
  %177 = vset.pattern.permute.xlu0 0
  %178 = vperm.xlu0 %177, %v172
  %v179 = vpop.permute.xlu0 %178
  %182 = vset.pattern.permute.xlu0 0
  %183 = vperm.xlu0 %182, %v173
  %v184 = vpop.permute.xlu0 %183
  %187 = vset.pattern.permute.xlu0 0
  %188 = vperm.xlu0 %187, %v174
  %v189 = vpop.permute.xlu0 %188
  %192 = vset.pattern.permute.xlu0 0
  %193 = vperm.xlu0 %192, %v175
  %v194 = vpop.permute.xlu0 %193
  %v196 = vmul.f32 %v179, %v168
  %v197 = vmul.f32 %v184, %v169
  %v198 = vmul.f32 %v189, %v170
  %v199 = vmul.f32 %v194, %v171
  %vm200 = vcmask 15360
  %v201 = vsel %vm200, %v196, 0.0
  %v202 = vsel %vm200, %v197, 0.0
  %v203 = vadd.f32 %v201, %v202
  %v204 = vsel %vm200, %v198, 0.0
  %v205 = vadd.f32 %v203, %v204
  %v206 = vsel %vm200, %v199, 0.0
  %v207 = vadd.f32 %v205, %v206
  %v208 = vrot.slane %v207, 4
  %v209 = vadd.f32 %v207, %v208
  %v210 = vrot.slane %v209, 2
  %v211 = vadd.f32 %v209, %v210
  %v212 = vrot.slane %v211, 1
  %v213 = vadd.f32 %v211, %v212
  %v214 = vld [vmem:[%s4] sm:$0x1]
  %216 = vset.pattern.permute.xlu0 0
  %217 = vperm.xlu0 %216, %v214
  %v218 = vpop.permute.xlu0 %217
  %v220 = vadd.f32 %v218, %v213
  %221 = vset.pattern.permute.xlu0 1
  %222 = vperm.xlu0 %221, %v172
  %v223 = vpop.permute.xlu0 %222
  %225 = vset.pattern.permute.xlu0 1
  %226 = vperm.xlu0 %225, %v173
  %v227 = vpop.permute.xlu0 %226
  %229 = vset.pattern.permute.xlu0 1
  %230 = vperm.xlu0 %229, %v174
  %v231 = vpop.permute.xlu0 %230
  %233 = vset.pattern.permute.xlu0 1
  %234 = vperm.xlu0 %233, %v175
  %v235 = vpop.permute.xlu0 %234
  %v237 = vmul.f32 %v223, %v168
  %v238 = vmul.f32 %v227, %v169
  %v239 = vmul.f32 %v231, %v170
  %v240 = vmul.f32 %v235, %v171
  %v241 = vsel %vm200, %v237, 0.0
  %v242 = vsel %vm200, %v238, 0.0
  %v243 = vadd.f32 %v241, %v242
  %v244 = vsel %vm200, %v239, 0.0
  %v245 = vadd.f32 %v243, %v244
  %v246 = vsel %vm200, %v240, 0.0
  %v247 = vadd.f32 %v245, %v246
  %v248 = vrot.slane %v247, 4
  %v249 = vadd.f32 %v247, %v248
  %v250 = vrot.slane %v249, 2
  %v251 = vadd.f32 %v249, %v250
  %v252 = vrot.slane %v251, 1
  %v253 = vadd.f32 %v251, %v252
  %v254 = vld [vmem:[%s4 + $0x1] sm:$0x1]
  %256 = vset.pattern.permute.xlu0 0
  %257 = vperm.xlu0 %256, %v254
  %v258 = vpop.permute.xlu0 %257
  %v260 = vadd.f32 %v258, %v253
  %v261 = vmax.f32 %v220, %v260
  %v262 = vsub.f32 %v220, %v261
  %v263 = vmul.f32 %v262, 1.442695
  %v264 = vpow.pop %v263
  %v265 = vsub.f32 %v260, %v261
  %v266 = vmul.f32 %v265, 1.442695
  %v267 = vpow.pop %v266
  %v268 = vadd.f32 %v264, %v267
  %v269 = vrcp.pop %v268
  %v270 = vmul.f32 1.0, %v269
  %v271 = vmul.f32 %v264, %v270
  %vm272 = vcmask 8192
  %273 = vst.msk [vmem:[%s5] sm:$0x1] %vm272, %v271
  %v274 = vmul.f32 %v267, %v270
  %275 = vst.msk [vmem:[%s5 + $0x1] sm:$0x1] %vm272, %v274
  // Predicated region
  $region22: #{policy_forward.1} parent=0 // pred_check
    _
  $region23: #{policy_forward.1} parent=0 // pred_check_branch
    %277 = sbr.rel (0) target = $region25
  $region24: #{policy_forward.1} parent=0 // pred_region
    _
  $region25: #{policy_forward.1} parent=0 // pred_fallthru
    _
  // Predicated region
  $region26: #{policy_forward.1} parent=0 // pred_check
    _
  $region27: #{policy_forward.1} parent=0 // pred_check_branch
    %279 = sbr.rel (0) target = $region29
  $region28: #{policy_forward.1} parent=0 // pred_region
    _
  $region29: #{policy_forward.1} parent=0 // pred_fallthru
    _

</llo_original>
